<compile_context>
chip_gen: v7x
topology: tpu7x:2x2x1
jax: 0.10.0
libtpu: 0.0.40
codegen_flags: <defaults>
</compile_context>

<pallas_src>
import functools

import jax
import jax.numpy as jnp
import numpy as np
from jax.experimental import pallas as pl
from jax.experimental.pallas import tpu as pltpu


def _round_up(x, m):
    return ((x + m - 1) // m) * m


def _mlp_kernel(x_ref, w1_ref, b1_ref, w2_ref, b2_ref, w3_ref, b3_ref, o_ref):
    """Fused MLP on one batch tile: (Linear+ReLU) x2 + Linear. Weights stay VMEM-resident."""
    w_dtype = w1_ref.dtype  # f32 or bf16; matmuls always accumulate in f32.

    x = x_ref[...].astype(w_dtype)

    # Layer 1: Linear(s_dim -> h_pad) + ReLU   (MXU matmul; bias add + max on VPU)
    h1 = jnp.dot(x, w1_ref[...], preferred_element_type=jnp.float32)
    h1 = jnp.maximum(h1 + b1_ref[...], 0.0)

    # Layer 2: Linear(h_pad -> h_pad) + ReLU
    h2 = jnp.dot(h1.astype(w_dtype), w2_ref[...], preferred_element_type=jnp.float32)
    h2 = jnp.maximum(h2 + b2_ref[...], 0.0)

    # Layer 3: Linear(h_pad -> a_pad), raw logits (matches forward(): no activation).
    out = jnp.dot(h2.astype(w_dtype), w3_ref[...], preferred_element_type=jnp.float32)
    out = out + b3_ref[...]

    o_ref[...] = out.astype(o_ref.dtype)


def prepare_params(params, weight_dtype=jnp.bfloat16, h_align=128):
    """One-time parameter prep (outside the hot path).

    * Zero-pads h_dim to a multiple of `h_align` and a_dim to a multiple of 128
      (lane-dense MXU N/K dims and unmasked full-lane output stores).  Padded
      columns stay exactly zero through ReLU, so the real columns are unchanged.
    * Casts weights to `weight_dtype` (default bf16 — recommended on v5e, v6e and
      v7x: all three MXUs are bf16-native, and bf16 halves weight DMA / resident
      VMEM).  Biases stay f32; matmul accumulation is f32 in the kernel.
    * Use h_align=256 on v6e/v7x when the real h_dim exceeds 128 (256x256 MXU);
      keep 128 on v5e (128x128 MXU) or for small h_dim.
    """
    w1, b1 = params["w1"], params["b1"]
    w2, b2 = params["w2"], params["b2"]
    w3, b3 = params["w3"], params["b3"]

    s_dim, h_dim = w1.shape
    a_dim = w3.shape[1]
    h_pad = _round_up(h_dim, h_align)
    a_pad = _round_up(a_dim, 128)

    return {
        "w1": jnp.pad(w1, ((0, 0), (0, h_pad - h_dim))).astype(weight_dtype),
        "b1": jnp.pad(b1, ((0, 0), (0, h_pad - h_dim))).astype(jnp.float32),
        "w2": jnp.pad(w2, ((0, h_pad - h_dim), (0, h_pad - h_dim))).astype(weight_dtype),
        "b2": jnp.pad(b2, ((0, 0), (0, h_pad - h_dim))).astype(jnp.float32),
        "w3": jnp.pad(w3, ((0, h_pad - h_dim), (0, a_pad - a_dim))).astype(weight_dtype),
        "b3": jnp.pad(b3, ((0, 0), (0, a_pad - a_dim))).astype(jnp.float32),
    }


@functools.partial(
    jax.jit,
    static_argnames=("target_block_b", "num_tensorcores", "out_dtype", "single_buffer_weights"),
)
def multi_discrete_policy_forward_padded(
    s,
    prepared,
    *,
    target_block_b=512,
    num_tensorcores=1,
    out_dtype=jnp.float32,
    single_buffer_weights=False,
):
    """a_weights = net(s) for MultiDiscretePolicy, returned lane-padded.

    s:        [B, s_dim] float32
    prepared: output of prepare_params()
    returns:  [B, a_pad] logits (a_pad = round_up(a_dim, 128)); the real logits are
              columns [:a_dim].  Consume the padded array directly (or fuse the
              slice downstream) — materializing out[:, :a_dim] separately costs an
              extra HBM pass + kernel launch.

    num_tensorcores: set to 2 on v7x so the batch grid can be sharded across both
    TensorCores; leave at 1 on single-TC parts (v5e/v6e), where extra grid steps
    are pure per-step overhead.
    """
    w1, b1 = prepared["w1"], prepared["b1"]
    w2, b2 = prepared["w2"], prepared["b2"]
    w3, b3 = prepared["w3"], prepared["b3"]

    B, s_dim = s.shape
    h_pad = w1.shape[1]
    a_pad = w3.shape[1]
    w_dtype = w1.dtype

    # ---- Batch tiling ------------------------------------------------------
    # bf16 activations pack 16 sublanes per vreg; f32 pack 8.
    row_align = 16 if w_dtype == jnp.bfloat16 else 8
    # Big tiles amortize the ~0.35us per-grid-step pipeline overhead.
    num_steps = pl.cdiv(B, target_block_b)
    if num_tensorcores > 1 and B > row_align:
        num_steps = max(num_steps, num_tensorcores)
    block_b = _round_up(pl.cdiv(B, num_steps), row_align)
    if block_b >= B:
        # Single full-extent block: always a legal block shape, zero batch padding.
        block_b = B
    grid_b = pl.cdiv(B, block_b)
    # No explicit batch-tail padding: the ragged last block reads undefined rows
    # past B (harmless — rows are independent, no cross-row reduction) and Pallas
    # drops the out-of-bounds writes.  Do NOT add any cross-row reduction here
    # without re-introducing explicit padding.

    # ---- Weight / bias specs: full arrays, constant index_map => VMEM-resident,
    # never re-fetched across the batch grid. ---------------------------------
    weight_kwargs = {}
    if single_buffer_weights:
        # Double-buffering a never-refetched operand only doubles resident VMEM;
        # enable this on v7x (64 MiB VMEM) when h_dim is large.
        weight_kwargs["pipeline_mode"] = pl.Buffered(1)

    def _w_spec(shape):
        return pl.BlockSpec(shape, lambda i: (0, 0), **weight_kwargs)

    # ---- Explicit VMEM budget (portable to v7x's tighter 64 MiB). -----------
    w_itemsize = np.dtype(w_dtype).itemsize
    out_itemsize = np.dtype(out_dtype).itemsize
    weight_bytes = (s_dim * h_pad + h_pad * h_pad + h_pad * a_pad) * w_itemsize \
                   + (2 * h_pad + a_pad) * 4
    act_bytes = block_b * (s_dim * np.dtype(s.dtype).itemsize + a_pad * out_itemsize)
    live_bytes = block_b * h_pad * 4 * 3  # x-cast / h1 / h2 intermediates (f32)
    est = 2 * (weight_bytes + act_bytes) + live_bytes  # default double-buffering
    vmem_limit = int(min(128 * 2**20, max(32 * 2**20, 2 * est)))

    out = pl.pallas_call(
        _mlp_kernel,
        out_shape=jax.ShapeDtypeStruct((B, a_pad), out_dtype),
        grid_spec=pl.GridSpec(
            grid=(grid_b,),
            in_specs=[
                # Batch tile of activations (s_dim is the full last dim -> valid block).
                pl.BlockSpec((block_b, s_dim), lambda i: (i, 0)),
                _w_spec((s_dim, h_pad)),
                _w_spec((1, h_pad)),
                _w_spec((h_pad, h_pad)),
                _w_spec((1, h_pad)),
                _w_spec((h_pad, a_pad)),
                _w_spec((1, a_pad)),
            ],
            # Lane-dense (multiple-of-128) output -> unmasked full-lane stores.
            out_specs=pl.BlockSpec((block_b, a_pad), lambda i: (i, 0)),
        ),
        compiler_params=pltpu.CompilerParams(
            dimension_semantics=("parallel",),
            vmem_limit_bytes=vmem_limit,
        ),
    )(s, w1, b1, w2, b2, w3, b3)
    return out


def multi_discrete_policy_forward(s, prepared, a_dim, **kwargs):
    """Convenience wrapper that strips the lane padding of a_dim.

    Prefer consuming the padded logits from multi_discrete_policy_forward_padded
    directly; this slice is an extra XLA kernel + HBM pass at small sizes.
    """
    return multi_discrete_policy_forward_padded(s, prepared, **kwargs)[:, :a_dim]


def init_params(key, s_dim, h_dim, a_dim, dtype=jnp.float32):
    """Deterministic synthetic init mimicking torch.nn.Linear's U(-1/sqrt(fan_in), +)."""
    ks = jax.random.split(key, 6)

    def lin(kw, kb, fan_in, fan_out):
        bound = 1.0 / jnp.sqrt(jnp.asarray(fan_in, dtype=jnp.float32))
        w = jax.random.uniform(kw, (fan_in, fan_out), dtype, -bound, bound)
        b = jax.random.uniform(kb, (1, fan_out), dtype, -bound, bound)
        return w, b

    w1, b1 = lin(ks[0], ks[1], s_dim, h_dim)
    w2, b2 = lin(ks[2], ks[3], h_dim, h_dim)
    w3, b3 = lin(ks[4], ks[5], h_dim, a_dim)
    return {"w1": w1, "b1": b1, "w2": w2, "b2": b2, "w3": w3, "b3": b3}


def _reference_forward(s, p):
    h1 = jnp.maximum(s @ p["w1"] + p["b1"], 0.0)
    h2 = jnp.maximum(h1 @ p["w2"] + p["b2"], 0.0)
    return h2 @ p["w3"] + p["b3"]


if __name__ == "__main__":
    key = jax.random.PRNGKey(0)
    k_param, k_s = jax.random.split(key)

    # Small shapes consistent with the module's forward: s is [b, s_dim].
    B, S_DIM, H_DIM, A_DIM = 40, 32, 64, 16
    A_PAD = _round_up(A_DIM, 128)

    params = init_params(k_param, S_DIM, H_DIM, A_DIM)
    s = jax.random.normal(k_s, (B, S_DIM), jnp.float32)
    ref = _reference_forward(s, params)

    # 1) f32 weights, single-TC heuristic: one grid step, block_b == B, no batch pad,
    #    no output slice inside the jitted path (exact vs. reference).
    prep_f32 = prepare_params(params, weight_dtype=jnp.float32)
    out_f32 = jax.block_until_ready(
        multi_discrete_policy_forward_padded(s, prep_f32)
    )
    assert out_f32.shape == (B, A_PAD)
    assert jnp.allclose(out_f32[:, :A_DIM], ref, atol=1e-5, rtol=1e-5)

    # 2) f32 weights, 2-TC (v7x) heuristic: 2 grid steps with a ragged last block
    #    (exercises the no-explicit-pad path; OOB rows are dropped by Pallas).
    out_2tc = jax.block_until_ready(
        multi_discrete_policy_forward_padded(s, prep_f32, num_tensorcores=2)
    )
    assert out_2tc.shape == (B, A_PAD)
    assert jnp.allclose(out_2tc[:, :A_DIM], ref, atol=1e-5, rtol=1e-5)

    # 3) Default fast path: bf16 weights (f32 accumulation) + bf16 logits.
    prep_bf16 = prepare_params(params)  # weight_dtype defaults to bf16
    out_bf16 = jax.block_until_ready(
        multi_discrete_policy_forward_padded(s, prep_bf16, out_dtype=jnp.bfloat16)
    )
    assert out_bf16.dtype == jnp.bfloat16
    assert jnp.allclose(out_bf16[:, :A_DIM].astype(jnp.float32), ref, atol=5e-2, rtol=5e-2)

    # 4) Tiny batch: block smaller than 8 sublanes falls back to a full-extent block.
    s_small = s[:3]
    out_small = jax.block_until_ready(
        multi_discrete_policy_forward(s_small, prep_f32, A_DIM)
    )
    assert out_small.shape == (3, A_DIM)
    assert jnp.allclose(out_small, ref[:3], atol=1e-5, rtol=1e-5)

    print("KERNEL_OK")
</pallas_src>

<mosaic_0001>
module attributes {stable_mosaic.version = 11 : i64} {
  func.func @_mlp_kernel(%arg0: i32, %arg1: memref<40x32xf32, #tpu.memory_space<vmem>>, %arg2: memref<32x128xf32, #tpu.memory_space<vmem>>, %arg3: memref<1x128xf32, #tpu.memory_space<vmem>>, %arg4: memref<128x128xf32, #tpu.memory_space<vmem>>, %arg5: memref<1x128xf32, #tpu.memory_space<vmem>>, %arg6: memref<128x128xf32, #tpu.memory_space<vmem>>, %arg7: memref<1x128xf32, #tpu.memory_space<vmem>>, %arg8: memref<40x128xf32, #tpu.memory_space<vmem>>) attributes {dimension_semantics = [#tpu.dimension_semantics<parallel>], iteration_bounds = array<i64: 1>, scalar_prefetch = 0 : i64, scratch_operands = 0 : i64, tpu.core_type = #tpu.core_type<tc>, window_params = [{transform_indices = @transform_0, window_bounds = array<i64: 40, 32>}, {pipeline_mode = #tpu.pipeline_mode<synchronous>, transform_indices = @transform_1, window_bounds = array<i64: 32, 128>}, {pipeline_mode = #tpu.pipeline_mode<synchronous>, transform_indices = @transform_2, window_bounds = array<i64: 1, 128>}, {pipeline_mode = #tpu.pipeline_mode<synchronous>, transform_indices = @transform_3, window_bounds = array<i64: 128, 128>}, {pipeline_mode = #tpu.pipeline_mode<synchronous>, transform_indices = @transform_4, window_bounds = array<i64: 1, 128>}, {pipeline_mode = #tpu.pipeline_mode<synchronous>, transform_indices = @transform_5, window_bounds = array<i64: 128, 128>}, {pipeline_mode = #tpu.pipeline_mode<synchronous>, transform_indices = @transform_6, window_bounds = array<i64: 1, 128>}, {transform_indices = @transform_7, window_bounds = array<i64: 40, 128>}]} {
    %c0 = arith.constant 0 : index
    %c0_0 = arith.constant 0 : index
    %0 = vector.load %arg1[%c0, %c0_0] : memref<40x32xf32, #tpu.memory_space<vmem>>, vector<40x32xf32>
    %c0_1 = arith.constant 0 : index
    %c0_2 = arith.constant 0 : index
    %1 = vector.load %arg2[%c0_1, %c0_2] : memref<32x128xf32, #tpu.memory_space<vmem>>, vector<32x128xf32>
    %cst = arith.constant dense<0.000000e+00> : vector<40x128xf32>
    %2 = tpu.matmul %0, %1, %cst {dimension_numbers = #tpu.dot_dimension_numbers<[1], [0], [0], [1], [0, 0, 1, 1], [], []>} : vector<40x32xf32>, vector<32x128xf32>, vector<40x128xf32> -> vector<40x128xf32>
    %c0_3 = arith.constant 0 : index
    %c0_4 = arith.constant 0 : index
    %3 = vector.load %arg3[%c0_3, %c0_4] : memref<1x128xf32, #tpu.memory_space<vmem>>, vector<1x128xf32>
    %4 = vector.broadcast %3 : vector<1x128xf32> to vector<40x128xf32>
    %5 = arith.addf %2, %4 : vector<40x128xf32>
    %cst_5 = arith.constant 0.000000e+00 : f32
    %6 = vector.broadcast %cst_5 : f32 to vector<40x128xf32>
    %7 = arith.maximumf %5, %6 : vector<40x128xf32>
    %c0_6 = arith.constant 0 : index
    %c0_7 = arith.constant 0 : index
    %8 = vector.load %arg4[%c0_6, %c0_7] : memref<128x128xf32, #tpu.memory_space<vmem>>, vector<128x128xf32>
    %cst_8 = arith.constant dense<0.000000e+00> : vector<40x128xf32>
    %9 = tpu.matmul %7, %8, %cst_8 {dimension_numbers = #tpu.dot_dimension_numbers<[1], [0], [0], [1], [0, 0, 1, 1], [], []>} : vector<40x128xf32>, vector<128x128xf32>, vector<40x128xf32> -> vector<40x128xf32>
    %c0_9 = arith.constant 0 : index
    %c0_10 = arith.constant 0 : index
    %10 = vector.load %arg5[%c0_9, %c0_10] : memref<1x128xf32, #tpu.memory_space<vmem>>, vector<1x128xf32>
    %11 = vector.broadcast %10 : vector<1x128xf32> to vector<40x128xf32>
    %12 = arith.addf %9, %11 : vector<40x128xf32>
    %cst_11 = arith.constant 0.000000e+00 : f32
    %13 = vector.broadcast %cst_11 : f32 to vector<40x128xf32>
    %14 = arith.maximumf %12, %13 : vector<40x128xf32>
    %c0_12 = arith.constant 0 : index
    %c0_13 = arith.constant 0 : index
    %15 = vector.load %arg6[%c0_12, %c0_13] : memref<128x128xf32, #tpu.memory_space<vmem>>, vector<128x128xf32>
    %cst_14 = arith.constant dense<0.000000e+00> : vector<40x128xf32>
    %16 = tpu.matmul %14, %15, %cst_14 {dimension_numbers = #tpu.dot_dimension_numbers<[1], [0], [0], [1], [0, 0, 1, 1], [], []>} : vector<40x128xf32>, vector<128x128xf32>, vector<40x128xf32> -> vector<40x128xf32>
    %c0_15 = arith.constant 0 : index
    %c0_16 = arith.constant 0 : index
    %17 = vector.load %arg7[%c0_15, %c0_16] : memref<1x128xf32, #tpu.memory_space<vmem>>, vector<1x128xf32>
    %18 = vector.broadcast %17 : vector<1x128xf32> to vector<40x128xf32>
    %19 = arith.addf %16, %18 : vector<40x128xf32>
    %c0_17 = arith.constant 0 : index
    %c0_18 = arith.constant 0 : index
    %20 = vector.load %arg8[%c0_17, %c0_18] : memref<40x128xf32, #tpu.memory_space<vmem>>, vector<40x128xf32>
    tpu.vector_store %arg8[%c0_17, %c0_18], %19 {strides = array<i32>} : memref<40x128xf32, #tpu.memory_space<vmem>>, vector<40x128xf32>,
    return
  }
  func.func @transform_0(%arg0: i32) -> (i32, i32) {
    %c0_i32 = arith.constant 0 : i32
    %c0_i32_0 = arith.constant 0 : i32
    return %arg0, %c0_i32 : i32, i32
  }
  func.func @transform_1(%arg0: i32) -> (i32, i32) {
    %c0_i32 = arith.constant 0 : i32
    %c0_i32_0 = arith.constant 0 : i32
    %c0_i32_1 = arith.constant 0 : i32
    return %c0_i32, %c0_i32_0 : i32, i32
  }
  func.func @transform_2(%arg0: i32) -> (i32, i32) {
    %c0_i32 = arith.constant 0 : i32
    %c0_i32_0 = arith.constant 0 : i32
    %c0_i32_1 = arith.constant 0 : i32
    return %c0_i32, %c0_i32_0 : i32, i32
  }
  func.func @transform_3(%arg0: i32) -> (i32, i32) {
    %c0_i32 = arith.constant 0 : i32
    %c0_i32_0 = arith.constant 0 : i32
    %c0_i32_1 = arith.constant 0 : i32
    return %c0_i32, %c0_i32_0 : i32, i32
  }
  func.func @transform_4(%arg0: i32) -> (i32, i32) {
    %c0_i32 = arith.constant 0 : i32
    %c0_i32_0 = arith.constant 0 : i32
    %c0_i32_1 = arith.constant 0 : i32
    return %c0_i32, %c0_i32_0 : i32, i32
  }
  func.func @transform_5(%arg0: i32) -> (i32, i32) {
    %c0_i32 = arith.constant 0 : i32
    %c0_i32_0 = arith.constant 0 : i32
    %c0_i32_1 = arith.constant 0 : i32
    return %c0_i32, %c0_i32_0 : i32, i32
  }
  func.func @transform_6(%arg0: i32) -> (i32, i32) {
    %c0_i32 = arith.constant 0 : i32
    %c0_i32_0 = arith.constant 0 : i32
    %c0_i32_1 = arith.constant 0 : i32
    return %c0_i32, %c0_i32_0 : i32, i32
  }
  func.func @transform_7(%arg0: i32) -> (i32, i32) {
    %c0_i32 = arith.constant 0 : i32
    %c0_i32_0 = arith.constant 0 : i32
    return %arg0, %c0_i32 : i32, i32
  }
}

</mosaic_0001>

<llo_original>
// kernel: multi_discrete_policy_forward_padded.1
$region0: #{multi_discrete_policy_forward_padded.1}
  #allocation0 [shape = 'u32[]', space=smem, size = 0x4, offset = 0x4, fixed_abs, tag = 'smem constant byte address 0x4 - core index']
  #allocation1 [shape = 'u32[144,128]{1,0:T(1,128)}', space=vmem, size = 0x12000, scoped, tag = 'internal scratch']
  %s0 = inlined_call_operand.vmem [shape: f32[40,32], index: 0, kind: input, shape index: {}]
  %s1 = inlined_call_operand.vmem [shape: f32[32,128], index: 1, kind: input, shape index: {}]
  %s2 = inlined_call_operand.vmem [shape: f32[1,128], index: 2, kind: input, shape index: {}]
  %s3 = inlined_call_operand.hbm [shape: f32[128,128], index: 3, kind: input, shape index: {}]
  %s4 = inlined_call_operand.vmem [shape: f32[1,128], index: 4, kind: input, shape index: {}]
  %s5 = inlined_call_operand.hbm [shape: f32[128,128], index: 5, kind: input, shape index: {}]
  %s6 = inlined_call_operand.vmem [shape: f32[1,128], index: 6, kind: input, shape index: {}]
  %s7 = inlined_call_operand.hbm [shape: f32[40,128], index: 7, kind: output, shape index: {}]
  %s8 = sld [smem:[#allocation0]]
  $region46: #{multi_discrete_policy_forward_padded.1} parent=0
    _
  %s10 = ssub.s32 1, %s8
  %s11 = scalar_select 0, %s10, %s8
  $region1: #{multi_discrete_policy_forward_padded.1} parent=0
    #allocation2 [shape = 'u8[65536]{0}', space=vmem, size = 0x10000, scoped, tag = 'input window, operand 3, single buffered']
    #allocation3 [shape = 's32[1]{0}', space=sflag, size = 0x4, scoped, tag = 'scoped memory for multi_discrete_policy_forward_padded.1']
    #allocation4 [shape = 's32[1]{0}', space=sflag, size = 0x4, scoped, tag = 'scoped memory for multi_discrete_policy_forward_padded.1']
    #allocation5 [shape = 'u8[65536]{0}', space=vmem, size = 0x10000, scoped, tag = 'input window, operand 5, single buffered']
    #allocation6 [shape = 's32[1]{0}', space=sflag, size = 0x4, scoped, tag = 'scoped memory for multi_discrete_policy_forward_padded.1']
    #allocation7 [shape = 'u8[20480]{0}', space=vmem, size = 0x5000, scoped, tag = 'output window, operand 0, single buffered']
    %12 = vsyncpa [#allocation3], 0
    %13 = vsyncpa [#allocation6], 0
    %14 = vsyncpa [#allocation4], 0
    // Predicated region
    $region2: #{multi_discrete_policy_forward_padded.1} parent=1 // pred_check
      _
    $region3: #{multi_discrete_policy_forward_padded.1} parent=1 // pred_check_branch
      %16 = sbr.rel (0) target = $region5
    $region4: #{multi_discrete_policy_forward_padded.1} parent=1 // pred_region
      _
    $region5: #{multi_discrete_policy_forward_padded.1} parent=1 // pred_fallthru
      _
    // Predicated region
    $region6: #{multi_discrete_policy_forward_padded.1} parent=1 // pred_check
      _
    $region7: #{multi_discrete_policy_forward_padded.1} parent=1 // pred_check_branch
      %18 = sbr.rel (0) target = $region9
    $region8: #{multi_discrete_policy_forward_padded.1} parent=1 // pred_region
      _
    $region9: #{multi_discrete_policy_forward_padded.1} parent=1 // pred_fallthru
      _
    // Predicated region
    $region10: #{multi_discrete_policy_forward_padded.1} parent=1 // pred_check
      _
    $region11: #{multi_discrete_policy_forward_padded.1} parent=1 // pred_check_branch
      %20 = sbr.rel (0) target = $region13
    $region12: #{multi_discrete_policy_forward_padded.1} parent=1 // pred_region
      _
    $region13: #{multi_discrete_policy_forward_padded.1} parent=1 // pred_fallthru
      _
    // Predicated region
    $region14: #{multi_discrete_policy_forward_padded.1} parent=1 // pred_check
      _
    $region15: #{multi_discrete_policy_forward_padded.1} parent=1 // pred_check_branch
      %22 = sbr.rel (0) target = $region17
    $region16: #{multi_discrete_policy_forward_padded.1} parent=1 // pred_region
      %s24 = ssub.s32 2048, 2048
      %25 = vsyncadd [#allocation3], %s24
      %s26 = sshll.u32 [#allocation2], 4
      %s27 = int_to_ptr.vmem [resolvable:$true] %s26
      %32 = dma.hbm_to_vmem [thread:$0]  %s3, 2048, %s27, [#allocation3], 128, 128, 8
    $region17: #{multi_discrete_policy_forward_padded.1} parent=1 // pred_fallthru
      _
    // Predicated region
    $region18: #{multi_discrete_policy_forward_padded.1} parent=1 // pred_check
      _
    $region19: #{multi_discrete_policy_forward_padded.1} parent=1 // pred_check_branch
      %34 = sbr.rel (0) target = $region21
    $region20: #{multi_discrete_policy_forward_padded.1} parent=1 // pred_region
      _
    $region21: #{multi_discrete_policy_forward_padded.1} parent=1 // pred_fallthru
      _
    // Predicated region
    $region22: #{multi_discrete_policy_forward_padded.1} parent=1 // pred_check
      _
    $region23: #{multi_discrete_policy_forward_padded.1} parent=1 // pred_check_branch
      %36 = sbr.rel (0) target = $region25
    $region24: #{multi_discrete_policy_forward_padded.1} parent=1 // pred_region
      %s38 = ssub.s32 2048, 2048
      %39 = vsyncadd [#allocation6], %s38
      %s40 = sshll.u32 [#allocation5], 4
      %s41 = int_to_ptr.vmem [resolvable:$true] %s40
      %46 = dma.hbm_to_vmem [thread:$0]  %s5, 2048, %s41, [#allocation6], 128, 128, 8
    $region25: #{multi_discrete_policy_forward_padded.1} parent=1 // pred_fallthru
      _
    // Predicated region
    $region26: #{multi_discrete_policy_forward_padded.1} parent=1 // pred_check
      _
    $region27: #{multi_discrete_policy_forward_padded.1} parent=1 // pred_check_branch
      %48 = sbr.rel (0) target = $region29
    $region28: #{multi_discrete_policy_forward_padded.1} parent=1 // pred_region
      _
    $region29: #{multi_discrete_policy_forward_padded.1} parent=1 // pred_fallthru
      _
    // Predicated region
    $region30: #{multi_discrete_policy_forward_padded.1} parent=1 // pred_check
      _
    $region31: #{multi_discrete_policy_forward_padded.1} parent=1 // pred_check_branch
      %50 = sbr.rel (0) target = $region33
    $region32: #{multi_discrete_policy_forward_padded.1} parent=1 // pred_region
      %51 = dma.done [#allocation3], 2048
    $region33: #{multi_discrete_policy_forward_padded.1} parent=1 // pred_fallthru
      _
    // Predicated region
    $region34: #{multi_discrete_policy_forward_padded.1} parent=1 // pred_check
      _
    $region35: #{multi_discrete_policy_forward_padded.1} parent=1 // pred_check_branch
      %53 = sbr.rel (0) target = $region37
    $region36: #{multi_discrete_policy_forward_padded.1} parent=1 // pred_region
      %54 = dma.done [#allocation6], 2048
    $region37: #{multi_discrete_policy_forward_padded.1} parent=1 // pred_fallthru
      _
    %v55 = vld [vmem:[%s0] sm:$0xff]
    %v56 = vld [vmem:[%s0 + $0x8] sm:$0xff]
    %v57 = vld [vmem:[%s0 + $0x10] sm:$0xff]
    %v58 = vld [vmem:[%s0 + $0x18] sm:$0xff]
    %v59 = vld [vmem:[%s0 + $0x20] sm:$0xff]
    %v60 = vld [vmem:[%s1] sm:$0xff]
    %v61 = vld [vmem:[%s1 + $0x8] sm:$0xff]
    %v62 = vld [vmem:[%s1 + $0x10] sm:$0xff]
    %v63 = vld [vmem:[%s1 + $0x18] sm:$0xff]
    %v64 = vld [vmem:[%s2] sm:$0x1]
    %v66 = vlaneseq
    %v67 = vshrl.u32 %v66, 7
    %v68 = vsub.s32 0, %v67
    %v69 = vrot.slane %v64, %v68
    %vm71 = vcmask 261120
    %v73 = vsel %vm71, %v55, 0
    %v76 = vsel %vm71, %v56, 0
    %v79 = vsel %vm71, %v57, 0
    %v82 = vsel %vm71, %v58, 0
    %v85 = vsel %vm71, %v59, 0
    %87 = vmatprep.subr.mxu0 0.0
    %88 = vmatpush1.msra.mxu0 %v60
    %89 = vmatprep.subr.mxu0 0.0
    %90 = vmatpush1.msra.mxu0 %v61
    %91 = vmatprep.subr.mxu0 0.0
    %92 = vmatpush1.msra.mxu0 %v62
    %93 = vmatprep.subr.mxu0 0.0
    %94 = vmatpush1.msra.mxu0 %v63
    %95 = vmatprep.subr.mxu0 0.0
    %96 = vmatpush1.msra.mxu0 0.0
    %97 = vmatprep.subr.mxu0 0.0
    %98 = vmatpush1.msra.mxu0 0.0
    %99 = vmatprep.subr.mxu0 0.0
    %100 = vmatpush1.msra.mxu0 0.0
    %101 = vmatprep.subr.mxu0 0.0
    %102 = vmatpush1.msra.mxu0 0.0
    %103 = vmatprep.subr.mxu0 0.0
    %104 = vmatpush1.msra.mxu0 0.0
    %105 = vmatprep.subr.mxu0 0.0
    %106 = vmatpush1.msra.mxu0 0.0
    %107 = vmatprep.subr.mxu0 0.0
    %108 = vmatpush1.msra.mxu0 0.0
    %109 = vmatprep.subr.mxu0 0.0
    %110 = vmatpush1.msra.mxu0 0.0
    %111 = vmatprep.subr.mxu0 0.0
    %112 = vmatpush1.msra.mxu0 0.0
    %113 = vmatprep.subr.mxu0 0.0
    %114 = vmatpush1.msra.mxu0 0.0
    %115 = vmatprep.subr.mxu0 0.0
    %116 = vmatpush1.msra.mxu0 0.0
    %117 = vmatprep.subr.mxu0 0.0
    %118 = vmatpush1.msra.mxu0 0.0
    %119 = vmatprep.subr.mxu0 0.0
    %120 = vmatpush1.msra.mxu0 0.0
    %121 = vmatprep.subr.mxu0 0.0
    %122 = vmatpush1.msra.mxu0 0.0
    %123 = vmatprep.subr.mxu0 0.0
    %124 = vmatpush1.msra.mxu0 0.0
    %125 = vmatprep.subr.mxu0 0.0
    %126 = vmatpush1.msra.mxu0 0.0
    %127 = vmatprep.subr.mxu0 0.0
    %128 = vmatpush1.msra.mxu0 0.0
    %129 = vmatprep.subr.mxu0 0.0
    %130 = vmatpush1.msra.mxu0 0.0
    %131 = vmatprep.subr.mxu0 0.0
    %132 = vmatpush1.msra.mxu0 0.0
    %133 = vmatprep.subr.mxu0 0.0
    %134 = vmatpush1.msra.mxu0 0.0
    %135 = vmatprep.subr.mxu0 0.0
    %136 = vmatpush1.msra.mxu0 0.0
    %137 = vmatprep.subr.mxu0 0.0
    %138 = vmatpush1.msra.mxu0 0.0
    %139 = vmatprep.subr.mxu0 0.0
    %140 = vmatpush1.msra.mxu0 0.0
    %141 = vmatprep.subr.mxu0 0.0
    %142 = vmatpush1.msra.mxu0 0.0
    %143 = vmatprep.subr.mxu0 0.0
    %144 = vmatpush1.msra.mxu0 0.0
    %145 = vmatprep.subr.mxu0 0.0
    %146 = vmatpush1.msra.mxu0 0.0
    %147 = vmatprep.subr.mxu0 0.0
    %148 = vmatpush1.msra.mxu0 0.0
    %149 = vmatprep.subr.mxu0 0.0
    %150 = vmatpush1.msra.mxu0 0.0
    %151 = vmatprep.mubr.f32.mxu0 0.0
    %152 = vmatmul.mubr.f32.gmra.mrb[0].mxu0 %v73
    %v153 = vpop.f32.mrb[0].mxu0
    %v154 = vadd.f32 %v69, %v153
    %v155 = vpop.f32.mrb[0].mxu0
    %156 = vmatprep.mubr.f32.mxu0 0.0
    %157 = vmatmul.mubr.f32.gmra.mrb[0].mxu0 %v76
    %v158 = vpop.f32.mrb[0].mxu0
    %v159 = vadd.f32 %v69, %v158
    %v160 = vpop.f32.mrb[0].mxu0
    %161 = vmatprep.mubr.f32.mxu0 0.0
    %162 = vmatmul.mubr.f32.gmra.mrb[0].mxu0 %v79
    %v163 = vpop.f32.mrb[0].mxu0
    %v164 = vadd.f32 %v69, %v163
    %v165 = vpop.f32.mrb[0].mxu0
    %166 = vmatprep.mubr.f32.mxu0 0.0
    %167 = vmatmul.mubr.f32.gmra.mrb[0].mxu0 %v82
    %v168 = vpop.f32.mrb[0].mxu0
    %v169 = vadd.f32 %v69, %v168
    %v170 = vpop.f32.mrb[0].mxu0
    %171 = vmatprep.mubr.f32.mxu0 0.0
    %172 = vmatmul.mubr.f32.gmra.mrb[0].mxu0 %v85
    %v173 = vpop.f32.mrb[0].mxu0
    %v174 = vadd.f32 %v69, %v173
    %v175 = vpop.f32.mrb[0].mxu0
    %176 = vdwg.mxu0
    %v177 = vmax.f32 %v154, 0.0
    %v178 = vmax.f32 %v159, 0.0
    %v179 = vmax.f32 %v164, 0.0
    %v180 = vmax.f32 %v169, 0.0
    %v181 = vmax.f32 %v174, 0.0
    %v182 = vld [vmem:[#allocation2] sm:$0xff]
    %v183 = vld [vmem:[#allocation2 + $0x8] sm:$0xff]
    %v184 = vld [vmem:[#allocation2 + $0x10] sm:$0xff]
    %v185 = vld [vmem:[#allocation2 + $0x18] sm:$0xff]
    %v186 = vld [vmem:[#allocation2 + $0x20] sm:$0xff]
    %v187 = vld [vmem:[#allocation2 + $0x28] sm:$0xff]
    %v188 = vld [vmem:[#allocation2 + $0x30] sm:$0xff]
    %v189 = vld [vmem:[#allocation2 + $0x38] sm:$0xff]
    %v190 = vld [vmem:[#allocation2 + $0x40] sm:$0xff]
    %v191 = vld [vmem:[#allocation2 + $0x48] sm:$0xff]
    %v192 = vld [vmem:[#allocation2 + $0x50] sm:$0xff]
    %v193 = vld [vmem:[#allocation2 + $0x58] sm:$0xff]
    %v194 = vld [vmem:[#allocation2 + $0x60] sm:$0xff]
    %v195 = vld [vmem:[#allocation2 + $0x68] sm:$0xff]
    %v196 = vld [vmem:[#allocation2 + $0x70] sm:$0xff]
    %v197 = vld [vmem:[#allocation2 + $0x78] sm:$0xff]
    %v198 = vld [vmem:[%s4] sm:$0x1]
    %v200 = vlaneseq
    %v201 = vshrl.u32 %v200, 7
    %v202 = vsub.s32 0, %v201
    %v203 = vrot.slane %v198, %v202
    %205 = vmatprep.subr.mxu0 0.0
    %206 = vmatpush1.msra.mxu0 %v182
    %207 = vmatprep.subr.mxu0 0.0
    %208 = vmatpush1.msra.mxu0 %v183
    %209 = vmatprep.subr.mxu0 0.0
    %210 = vmatpush1.msra.mxu0 %v184
    %211 = vmatprep.subr.mxu0 0.0
    %212 = vmatpush1.msra.mxu0 %v185
    %213 = vmatprep.subr.mxu0 0.0
    %214 = vmatpush1.msra.mxu0 %v186
    %215 = vmatprep.subr.mxu0 0.0
    %216 = vmatpush1.msra.mxu0 %v187
    %217 = vmatprep.subr.mxu0 0.0
    %218 = vmatpush1.msra.mxu0 %v188
    %219 = vmatprep.subr.mxu0 0.0
    %220 = vmatpush1.msra.mxu0 %v189
    %221 = vmatprep.subr.mxu0 0.0
    %222 = vmatpush1.msra.mxu0 %v190
    %223 = vmatprep.subr.mxu0 0.0
    %224 = vmatpush1.msra.mxu0 %v191
    %225 = vmatprep.subr.mxu0 0.0
    %226 = vmatpush1.msra.mxu0 %v192
    %227 = vmatprep.subr.mxu0 0.0
    %228 = vmatpush1.msra.mxu0 %v193
    %229 = vmatprep.subr.mxu0 0.0
    %230 = vmatpush1.msra.mxu0 %v194
    %231 = vmatprep.subr.mxu0 0.0
    %232 = vmatpush1.msra.mxu0 %v195
    %233 = vmatprep.subr.mxu0 0.0
    %234 = vmatpush1.msra.mxu0 %v196
    %235 = vmatprep.subr.mxu0 0.0
    %236 = vmatpush1.msra.mxu0 %v197
    %237 = vmatprep.subr.mxu0 0.0
    %238 = vmatpush1.msra.mxu0 0.0
    %239 = vmatprep.subr.mxu0 0.0
    %240 = vmatpush1.msra.mxu0 0.0
    %241 = vmatprep.subr.mxu0 0.0
    %242 = vmatpush1.msra.mxu0 0.0
    %243 = vmatprep.subr.mxu0 0.0
    %244 = vmatpush1.msra.mxu0 0.0
    %245 = vmatprep.subr.mxu0 0.0
    %246 = vmatpush1.msra.mxu0 0.0
    %247 = vmatprep.subr.mxu0 0.0
    %248 = vmatpush1.msra.mxu0 0.0
    %249 = vmatprep.subr.mxu0 0.0
    %250 = vmatpush1.msra.mxu0 0.0
    %251 = vmatprep.subr.mxu0 0.0
    %252 = vmatpush1.msra.mxu0 0.0
    %253 = vmatprep.subr.mxu0 0.0
    %254 = vmatpush1.msra.mxu0 0.0
    %255 = vmatprep.subr.mxu0 0.0
    %256 = vmatpush1.msra.mxu0 0.0
    %257 = vmatprep.subr.mxu0 0.0
    %258 = vmatpush1.msra.mxu0 0.0
    %259 = vmatprep.subr.mxu0 0.0
    %260 = vmatpush1.msra.mxu0 0.0
    %261 = vmatprep.subr.mxu0 0.0
    %262 = vmatpush1.msra.mxu0 0.0
    %263 = vmatprep.subr.mxu0 0.0
    %264 = vmatpush1.msra.mxu0 0.0
    %265 = vmatprep.subr.mxu0 0.0
    %266 = vmatpush1.msra.mxu0 0.0
    %267 = vmatprep.subr.mxu0 0.0
    %268 = vmatpush1.msra.mxu0 0.0
    %269 = vmatprep.mubr.f32.mxu0 0.0
    %270 = vmatmul.mubr.f32.gmra.mrb[0].mxu0 %v177
    %v271 = vpop.f32.mrb[0].mxu0
    %v272 = vadd.f32 %v203, %v271
    %v273 = vpop.f32.mrb[0].mxu0
    %274 = vmatprep.mubr.f32.mxu0 0.0
    %275 = vmatmul.mubr.f32.gmra.mrb[0].mxu0 %v178
    %v276 = vpop.f32.mrb[0].mxu0
    %v277 = vadd.f32 %v203, %v276
    %v278 = vpop.f32.mrb[0].mxu0
    %279 = vmatprep.mubr.f32.mxu0 0.0
    %280 = vmatmul.mubr.f32.gmra.mrb[0].mxu0 %v179
    %v281 = vpop.f32.mrb[0].mxu0
    %v282 = vadd.f32 %v203, %v281
    %v283 = vpop.f32.mrb[0].mxu0
    %284 = vmatprep.mubr.f32.mxu0 0.0
    %285 = vmatmul.mubr.f32.gmra.mrb[0].mxu0 %v180
    %v286 = vpop.f32.mrb[0].mxu0
    %v287 = vadd.f32 %v203, %v286
    %v288 = vpop.f32.mrb[0].mxu0
    %289 = vmatprep.mubr.f32.mxu0 0.0
    %290 = vmatmul.mubr.f32.gmra.mrb[0].mxu0 %v181
    %v291 = vpop.f32.mrb[0].mxu0
    %v292 = vadd.f32 %v203, %v291
    %v293 = vpop.f32.mrb[0].mxu0
    %294 = vdwg.mxu0
    %v295 = vmax.f32 %v272, 0.0
    %v296 = vmax.f32 %v277, 0.0
    %v297 = vmax.f32 %v282, 0.0
    %v298 = vmax.f32 %v287, 0.0
    %v299 = vmax.f32 %v292, 0.0
    %v300 = vld [vmem:[#allocation5] sm:$0xff]
    %v301 = vld [vmem:[#allocation5 + $0x8] sm:$0xff]
    %v302 = vld [vmem:[#allocation5 + $0x10] sm:$0xff]
    %v303 = vld [vmem:[#allocation5 + $0x18] sm:$0xff]
    %v304 = vld [vmem:[#allocation5 + $0x20] sm:$0xff]
    %v305 = vld [vmem:[#allocation5 + $0x28] sm:$0xff]
    %v306 = vld [vmem:[#allocation5 + $0x30] sm:$0xff]
    %v307 = vld [vmem:[#allocation5 + $0x38] sm:$0xff]
    %v308 = vld [vmem:[#allocation5 + $0x40] sm:$0xff]
    %v309 = vld [vmem:[#allocation5 + $0x48] sm:$0xff]
    %v310 = vld [vmem:[#allocation5 + $0x50] sm:$0xff]
    %v311 = vld [vmem:[#allocation5 + $0x58] sm:$0xff]
    %v312 = vld [vmem:[#allocation5 + $0x60] sm:$0xff]
    %v313 = vld [vmem:[#allocation5 + $0x68] sm:$0xff]
    %v314 = vld [vmem:[#allocation5 + $0x70] sm:$0xff]
    %v315 = vld [vmem:[#allocation5 + $0x78] sm:$0xff]
    %v316 = vld [vmem:[%s6] sm:$0x1]
    %v318 = vlaneseq
    %v319 = vshrl.u32 %v318, 7
    %v320 = vsub.s32 0, %v319
    %v321 = vrot.slane %v316, %v320
    %323 = vmatprep.subr.mxu0 0.0
    %324 = vmatpush1.msra.mxu0 %v300
    %325 = vmatprep.subr.mxu0 0.0
    %326 = vmatpush1.msra.mxu0 %v301
    %327 = vmatprep.subr.mxu0 0.0
    %328 = vmatpush1.msra.mxu0 %v302
    %329 = vmatprep.subr.mxu0 0.0
    %330 = vmatpush1.msra.mxu0 %v303
    %331 = vmatprep.subr.mxu0 0.0
    %332 = vmatpush1.msra.mxu0 %v304
    %333 = vmatprep.subr.mxu0 0.0
    %334 = vmatpush1.msra.mxu0 %v305
    %335 = vmatprep.subr.mxu0 0.0
    %336 = vmatpush1.msra.mxu0 %v306
    %337 = vmatprep.subr.mxu0 0.0
    %338 = vmatpush1.msra.mxu0 %v307
    %339 = vmatprep.subr.mxu0 0.0
    %340 = vmatpush1.msra.mxu0 %v308
    %341 = vmatprep.subr.mxu0 0.0
    %342 = vmatpush1.msra.mxu0 %v309
    %343 = vmatprep.subr.mxu0 0.0
    %344 = vmatpush1.msra.mxu0 %v310
    %345 = vmatprep.subr.mxu0 0.0
    %346 = vmatpush1.msra.mxu0 %v311
    %347 = vmatprep.subr.mxu0 0.0
    %348 = vmatpush1.msra.mxu0 %v312
    %349 = vmatprep.subr.mxu0 0.0
    %350 = vmatpush1.msra.mxu0 %v313
    %351 = vmatprep.subr.mxu0 0.0
    %352 = vmatpush1.msra.mxu0 %v314
    %353 = vmatprep.subr.mxu0 0.0
    %354 = vmatpush1.msra.mxu0 %v315
    %355 = vmatprep.subr.mxu0 0.0
    %356 = vmatpush1.msra.mxu0 0.0
    %357 = vmatprep.subr.mxu0 0.0
    %358 = vmatpush1.msra.mxu0 0.0
    %359 = vmatprep.subr.mxu0 0.0
    %360 = vmatpush1.msra.mxu0 0.0
    %361 = vmatprep.subr.mxu0 0.0
    %362 = vmatpush1.msra.mxu0 0.0
    %363 = vmatprep.subr.mxu0 0.0
    %364 = vmatpush1.msra.mxu0 0.0
    %365 = vmatprep.subr.mxu0 0.0
    %366 = vmatpush1.msra.mxu0 0.0
    %367 = vmatprep.subr.mxu0 0.0
    %368 = vmatpush1.msra.mxu0 0.0
    %369 = vmatprep.subr.mxu0 0.0
    %370 = vmatpush1.msra.mxu0 0.0
    %371 = vmatprep.subr.mxu0 0.0
    %372 = vmatpush1.msra.mxu0 0.0
    %373 = vmatprep.subr.mxu0 0.0
    %374 = vmatpush1.msra.mxu0 0.0
    %375 = vmatprep.subr.mxu0 0.0
    %376 = vmatpush1.msra.mxu0 0.0
    %377 = vmatprep.subr.mxu0 0.0
    %378 = vmatpush1.msra.mxu0 0.0
    %379 = vmatprep.subr.mxu0 0.0
    %380 = vmatpush1.msra.mxu0 0.0
    %381 = vmatprep.subr.mxu0 0.0
    %382 = vmatpush1.msra.mxu0 0.0
    %383 = vmatprep.subr.mxu0 0.0
    %384 = vmatpush1.msra.mxu0 0.0
    %385 = vmatprep.subr.mxu0 0.0
    %386 = vmatpush1.msra.mxu0 0.0
    %387 = vmatprep.mubr.f32.mxu0 0.0
    %388 = vmatmul.mubr.f32.gmra.mrb[0].mxu0 %v295
    %v389 = vpop.f32.mrb[0].mxu0
    %v390 = vadd.f32 %v321, %v389
    %v391 = vpop.f32.mrb[0].mxu0
    %392 = vmatprep.mubr.f32.mxu0 0.0
    %393 = vmatmul.mubr.f32.gmra.mrb[0].mxu0 %v296
    %v394 = vpop.f32.mrb[0].mxu0
    %v395 = vadd.f32 %v321, %v394
    %v396 = vpop.f32.mrb[0].mxu0
    %397 = vmatprep.mubr.f32.mxu0 0.0
    %398 = vmatmul.mubr.f32.gmra.mrb[0].mxu0 %v297
    %v399 = vpop.f32.mrb[0].mxu0
    %v400 = vadd.f32 %v321, %v399
    %v401 = vpop.f32.mrb[0].mxu0
    %402 = vmatprep.mubr.f32.mxu0 0.0
    %403 = vmatmul.mubr.f32.gmra.mrb[0].mxu0 %v298
    %v404 = vpop.f32.mrb[0].mxu0
    %v405 = vadd.f32 %v321, %v404
    %v406 = vpop.f32.mrb[0].mxu0
    %407 = vmatprep.mubr.f32.mxu0 0.0
    %408 = vmatmul.mubr.f32.gmra.mrb[0].mxu0 %v299
    %v409 = vpop.f32.mrb[0].mxu0
    %v410 = vadd.f32 %v321, %v409
    %v411 = vpop.f32.mrb[0].mxu0
    %412 = vdwg.mxu0
    %413 = vst [vmem:[#allocation7] sm:$0xff] %v390
    %414 = vst [vmem:[#allocation7 + $0x8] sm:$0xff] %v395
    %415 = vst [vmem:[#allocation7 + $0x10] sm:$0xff] %v400
    %416 = vst [vmem:[#allocation7 + $0x18] sm:$0xff] %v405
    %417 = vst [vmem:[#allocation7 + $0x20] sm:$0xff] %v410
    // Predicated region
    $region38: #{multi_discrete_policy_forward_padded.1} parent=1 // pred_check
      _
    $region39: #{multi_discrete_policy_forward_padded.1} parent=1 // pred_check_branch
      %419 = sbr.rel (0) target = $region41
    $region40: #{multi_discrete_policy_forward_padded.1} parent=1 // pred_region
      %s421 = ssub.s32 640, 640
      %422 = vsyncadd [#allocation4], %s421
      %s423 = sshll.u32 [#allocation7], 4
      %s424 = int_to_ptr.vmem [resolvable:$true] %s423
      %429 = dma.vmem_to_hbm [thread:$0]  %s424, 640, %s7, [#allocation4], 128, 128, 8
    $region41: #{multi_discrete_policy_forward_padded.1} parent=1 // pred_fallthru
      _
    // Predicated region
    $region42: #{multi_discrete_policy_forward_padded.1} parent=1 // pred_check
      _
    $region43: #{multi_discrete_policy_forward_padded.1} parent=1 // pred_check_branch
      %431 = sbr.rel (0) target = $region45
    $region44: #{multi_discrete_policy_forward_padded.1} parent=1 // pred_region
      %432 = dma.done [#allocation4], 640
    $region45: #{multi_discrete_policy_forward_padded.1} parent=1 // pred_fallthru
      _
    %433 = vsyncpa [#allocation3], 1
    %434 = vsyncpa [#allocation6], 1
    %435 = vsyncpa [#allocation4], 1

</llo_original>
